<compile_context>
chip_gen: v5e
topology: v5e:2x2
jax: 0.10.0
libtpu: 0.0.40
codegen_flags: <defaults>
</compile_context>

<pallas_src>
import functools

import jax
import jax.numpy as jnp
from jax.experimental import pallas as pl
from jax.experimental.pallas import tpu as pltpu

LAYER_LIST = [128, 64, 16, 10]
_HIGHEST = jax.lax.Precision.HIGHEST


def _round_up(x, m):
    return ((x + m - 1) // m) * m


def affine_kernel(x_ref, w_ref, b_ref, o_ref):
    # (tb, d_in) @ (d_in, d_out) + (1, d_out) -> (tb, d_out)
    acc = jnp.dot(
        x_ref[...],
        w_ref[...],
        preferred_element_type=jnp.float32,
        precision=_HIGHEST,
    )
    o_ref[...] = (acc + b_ref[...]).astype(o_ref.dtype)


def _collapse_params(params):
    """Collapse the activation-free chain into a single affine map."""
    (w1, b1), (w2, b2), (w3, b3) = params
    w_eff = jnp.dot(jnp.dot(w1, w2, precision=_HIGHEST), w3, precision=_HIGHEST)
    b_eff = (
        jnp.dot(
            jnp.dot(b1, w2, precision=_HIGHEST) + b2, w3, precision=_HIGHEST
        )
        + b3
    )
    return w_eff, b_eff


def _affine_pallas(x, w_eff, b_eff, *, tile_b):
    B, d_in = x.shape
    d_out = w_eff.shape[1]

    # Pad the batch only to the f32 sublane (8) — never to a full tile.
    b_padded = _round_up(max(B, 1), 8)
    if b_padded != B:
        x = jnp.pad(x, ((0, b_padded - B), (0, 0)))

    # Tile: big enough to amortize the ~0.35 us per-grid-step overhead, but
    # capped so the parallel 1-D grid keeps >= ~4 tiles (v7x has 2 TCs).
    tb = min(tile_b, _round_up(pl.cdiv(b_padded, 4), 8), b_padded)
    tb = max(tb, 8)
    grid = (pl.cdiv(b_padded, tb),)

    out = pl.pallas_call(
        affine_kernel,
        out_shape=jax.ShapeDtypeStruct((b_padded, d_out), jnp.float32),
        grid=grid,
        in_specs=[
            pl.BlockSpec((tb, d_in), lambda i: (i, 0)),     # x tile (pipelined)
            pl.BlockSpec((d_in, d_out), lambda i: (0, 0)),  # W_eff (resident)
            pl.BlockSpec((1, d_out), lambda i: (0, 0)),     # b_eff (resident)
        ],
        out_specs=pl.BlockSpec((tb, d_out), lambda i: (i, 0)),
        compiler_params=pltpu.CompilerParams(
            dimension_semantics=("parallel",),  # v7x: 2 TCs share the batch grid
        ),
    )(x, w_eff, b_eff)

    if b_padded != B:
        out = out[:B]
    return out


@functools.partial(jax.jit, static_argnames=("tile_b",))
def fmodel_forward(x, params, *, tile_b=2048):
    """Forward pass of fModel: layer3(layer2(layer1(x))), no activations."""
    w_eff, b_eff = _collapse_params(params)
    return _affine_pallas(x, w_eff, b_eff, tile_b=tile_b)


def init_params(key, layer_list):
    """Deterministic init matching nn.Linear shapes.

    PyTorch stores weight as (out, in); we store the transpose (in, out) so
    every layer is x @ W + b.  Biases are kept 2D (1, out).
    """
    params = []
    for i in range(len(layer_list) - 1):
        d_in, d_out = layer_list[i], layer_list[i + 1]
        key, kw, kb = jax.random.split(key, 3)
        bound = 1.0 / (d_in ** 0.5)
        w = jax.random.uniform(kw, (d_in, d_out), jnp.float32, -bound, bound)
        b = jax.random.uniform(kb, (1, d_out), jnp.float32, -bound, bound)
        params.append((w, b))
    return params


def reference_forward(x, params):
    out = x
    for w, b in params:
        out = jnp.dot(out, w, precision=_HIGHEST) + b
    return out


if __name__ == "__main__":
    key = jax.random.PRNGKey(0)
    key, kx = jax.random.split(key)
    B = 8
    x = jax.random.normal(kx, (B, LAYER_LIST[0]), jnp.float32)
    params = init_params(key, LAYER_LIST)

    out = fmodel_forward(x, params)
    jax.block_until_ready(out)

    ref = reference_forward(x, params)
    assert out.shape == (B, LAYER_LIST[-1]), out.shape
    assert jnp.allclose(out, ref, atol=1e-4, rtol=1e-4)
    print("KERNEL_OK")
</pallas_src>

<mosaic_0001>
module attributes {stable_mosaic.version = 11 : i64} {
  func.func @affine_kernel(%arg0: i32, %arg1: memref<8x128xf32, #tpu.memory_space<vmem>>, %arg2: memref<128x10xf32, #tpu.memory_space<vmem>>, %arg3: memref<1x10xf32, #tpu.memory_space<vmem>>, %arg4: memref<8x10xf32, #tpu.memory_space<vmem>>) attributes {dimension_semantics = [#tpu.dimension_semantics<parallel>], iteration_bounds = array<i64: 1>, scalar_prefetch = 0 : i64, scratch_operands = 0 : i64, tpu.core_type = #tpu.core_type<tc>, window_params = [{transform_indices = @transform_0, window_bounds = array<i64: 8, 128>}, {pipeline_mode = #tpu.pipeline_mode<synchronous>, transform_indices = @transform_1, window_bounds = array<i64: 128, 10>}, {pipeline_mode = #tpu.pipeline_mode<synchronous>, transform_indices = @transform_2, window_bounds = array<i64: 1, 10>}, {transform_indices = @transform_3, window_bounds = array<i64: 8, 10>}]} {
    %c0 = arith.constant 0 : index
    %c0_0 = arith.constant 0 : index
    %0 = vector.load %arg1[%c0, %c0_0] : memref<8x128xf32, #tpu.memory_space<vmem>>, vector<8x128xf32>
    %c0_1 = arith.constant 0 : index
    %c0_2 = arith.constant 0 : index
    %1 = vector.load %arg2[%c0_1, %c0_2] : memref<128x10xf32, #tpu.memory_space<vmem>>, vector<128x10xf32>
    %cst = arith.constant dense<0.000000e+00> : vector<8x10xf32>
    %2 = tpu.matmul %0, %1, %cst {dimension_numbers = #tpu.dot_dimension_numbers<[1], [0], [0], [1], [0, 0, 1, 1], [], []>, precision = #tpu.contract_precision<fp32>} : vector<8x128xf32>, vector<128x10xf32>, vector<8x10xf32> -> vector<8x10xf32>
    %c0_3 = arith.constant 0 : index
    %c0_4 = arith.constant 0 : index
    %3 = vector.load %arg3[%c0_3, %c0_4] : memref<1x10xf32, #tpu.memory_space<vmem>>, vector<1x10xf32>
    %4 = vector.broadcast %3 : vector<1x10xf32> to vector<8x10xf32>
    %5 = arith.addf %2, %4 : vector<8x10xf32>
    %c0_5 = arith.constant 0 : index
    %c0_6 = arith.constant 0 : index
    %6 = vector.load %arg4[%c0_5, %c0_6] : memref<8x10xf32, #tpu.memory_space<vmem>>, vector<8x10xf32>
    tpu.vector_store %arg4[%c0_5, %c0_6], %5 {strides = array<i32>} : memref<8x10xf32, #tpu.memory_space<vmem>>, vector<8x10xf32>,
    return
  }
  func.func @transform_0(%arg0: i32) -> (i32, i32) {
    %c0_i32 = arith.constant 0 : i32
    %c0_i32_0 = arith.constant 0 : i32
    return %arg0, %c0_i32 : i32, i32
  }
  func.func @transform_1(%arg0: i32) -> (i32, i32) {
    %c0_i32 = arith.constant 0 : i32
    %c0_i32_0 = arith.constant 0 : i32
    %c0_i32_1 = arith.constant 0 : i32
    return %c0_i32, %c0_i32_0 : i32, i32
  }
  func.func @transform_2(%arg0: i32) -> (i32, i32) {
    %c0_i32 = arith.constant 0 : i32
    %c0_i32_0 = arith.constant 0 : i32
    %c0_i32_1 = arith.constant 0 : i32
    return %c0_i32, %c0_i32_0 : i32, i32
  }
  func.func @transform_3(%arg0: i32) -> (i32, i32) {
    %c0_i32 = arith.constant 0 : i32
    %c0_i32_0 = arith.constant 0 : i32
    return %arg0, %c0_i32 : i32, i32
  }
}

</mosaic_0001>

<llo_original>
// kernel: fmodel_forward.1
$region0: #{fmodel_forward.1}
  #allocation0 [shape = 'u32[]', space=smem, size = 0x4, offset = 0x4, fixed_abs, tag = 'smem constant byte address 0x4 - core index']
  #allocation1 [shape = 'u32[72,128]{1,0:T(1,128)}', space=vmem, size = 0x9000, scoped, tag = 'internal scratch']
  %s0 = inlined_call_operand.vmem [shape: f32[8,128], index: 0, kind: input, shape index: {}]
  %s1 = inlined_call_operand.vmem [shape: f32[128,10], index: 1, kind: input, shape index: {}]
  %s2 = inlined_call_operand.vmem [shape: f32[1,10], index: 2, kind: input, shape index: {}]
  %s3 = inlined_call_operand.hbm [shape: f32[8,10], index: 3, kind: output, shape index: {}]
  %s4 = sld [smem:[#allocation0]]
  $region22: #{fmodel_forward.1} parent=0
    _
  %s6 = ssub.s32 1, %s4
  %s7 = scalar_select 0, %s6, %s4
  $region1: #{fmodel_forward.1} parent=0
    #allocation2 [shape = 'u8[4096]{0}', space=vmem, size = 0x1000, scoped, tag = 'output window, operand 0, single buffered']
    #allocation3 [shape = 's32[1]{0}', space=sflag, size = 0x4, scoped, tag = 'scoped memory for fmodel_forward.1']
    %8 = vsyncpa [#allocation3], 0
    // Predicated region
    $region2: #{fmodel_forward.1} parent=1 // pred_check
      _
    $region3: #{fmodel_forward.1} parent=1 // pred_check_branch
      %10 = sbr.rel (0) target = $region5
    $region4: #{fmodel_forward.1} parent=1 // pred_region
      _
    $region5: #{fmodel_forward.1} parent=1 // pred_fallthru
      _
    // Predicated region
    $region6: #{fmodel_forward.1} parent=1 // pred_check
      _
    $region7: #{fmodel_forward.1} parent=1 // pred_check_branch
      %12 = sbr.rel (0) target = $region9
    $region8: #{fmodel_forward.1} parent=1 // pred_region
      _
    $region9: #{fmodel_forward.1} parent=1 // pred_fallthru
      _
    // Predicated region
    $region10: #{fmodel_forward.1} parent=1 // pred_check
      _
    $region11: #{fmodel_forward.1} parent=1 // pred_check_branch
      %14 = sbr.rel (0) target = $region13
    $region12: #{fmodel_forward.1} parent=1 // pred_region
      _
    $region13: #{fmodel_forward.1} parent=1 // pred_fallthru
      _
    %v15 = vld [vmem:[%s0] sm:$0xff]
    %v16 = vld [vmem:[%s1] sm:$0xff]
    %v17 = vld [vmem:[%s1 + $0x8] sm:$0xff]
    %v18 = vld [vmem:[%s1 + $0x10] sm:$0xff]
    %v19 = vld [vmem:[%s1 + $0x18] sm:$0xff]
    %v20 = vld [vmem:[%s1 + $0x20] sm:$0xff]
    %v21 = vld [vmem:[%s1 + $0x28] sm:$0xff]
    %v22 = vld [vmem:[%s1 + $0x30] sm:$0xff]
    %v23 = vld [vmem:[%s1 + $0x38] sm:$0xff]
    %v24 = vld [vmem:[%s1 + $0x40] sm:$0xff]
    %v25 = vld [vmem:[%s1 + $0x48] sm:$0xff]
    %v26 = vld [vmem:[%s1 + $0x50] sm:$0xff]
    %v27 = vld [vmem:[%s1 + $0x58] sm:$0xff]
    %v28 = vld [vmem:[%s1 + $0x60] sm:$0xff]
    %v29 = vld [vmem:[%s1 + $0x68] sm:$0xff]
    %v30 = vld [vmem:[%s1 + $0x70] sm:$0xff]
    %v31 = vld [vmem:[%s1 + $0x78] sm:$0xff]
    %v32 = vld [vmem:[%s2] sm:$0x1]
    %v34 = vperm.slane %v32, 0
    %v36 = vand.u32 %v31, 4294901760
    %37 = vmatpush.msra.mxu0 %v36
    %v38 = vand.u32 %v30, 4294901760
    %39 = vmatpush.msra.mxu0 %v38
    %v40 = vand.u32 %v29, 4294901760
    %41 = vmatpush.msra.mxu0 %v40
    %v42 = vand.u32 %v28, 4294901760
    %43 = vmatpush.msra.mxu0 %v42
    %v44 = vand.u32 %v27, 4294901760
    %45 = vmatpush.msra.mxu0 %v44
    %v46 = vand.u32 %v26, 4294901760
    %47 = vmatpush.msra.mxu0 %v46
    %v48 = vand.u32 %v25, 4294901760
    %49 = vmatpush.msra.mxu0 %v48
    %v50 = vand.u32 %v24, 4294901760
    %51 = vmatpush.msra.mxu0 %v50
    %v52 = vand.u32 %v23, 4294901760
    %53 = vmatpush.msra.mxu0 %v52
    %v54 = vand.u32 %v22, 4294901760
    %55 = vmatpush.msra.mxu0 %v54
    %v56 = vand.u32 %v21, 4294901760
    %57 = vmatpush.msra.mxu0 %v56
    %v58 = vand.u32 %v20, 4294901760
    %59 = vmatpush.msra.mxu0 %v58
    %v60 = vand.u32 %v19, 4294901760
    %61 = vmatpush.msra.mxu0 %v60
    %v62 = vand.u32 %v18, 4294901760
    %63 = vmatpush.msra.mxu0 %v62
    %v64 = vand.u32 %v17, 4294901760
    %65 = vmatpush.msra.mxu0 %v64
    %v66 = vand.u32 %v16, 4294901760
    %67 = vmatpush.msra.mxu0 %v66
    %v68 = vand.u32 %v15, 4294901760
    %v69 = vsub.f32 %v15, %v68
    %v70 = vand.u32 %v69, 4294901760
    %v71 = vsub.f32 %v69, %v70
    %v72 = vand.u32 %v71, 4294901760
    %73 = vmatmul.f32.gmra.mxu0 %v72
    %v74 = vpop.f32.mrf.mxu0
    %v75 = vadd.f32 %v34, %v74
    %76 = vdwg.mxu0
    %v77 = vand.u32 %v31, 4294901760
    %v78 = vsub.f32 %v31, %v77
    %v79 = vand.u32 %v78, 4294901760
    %v80 = vsub.f32 %v78, %v79
    %v81 = vand.u32 %v80, 4294901760
    %82 = vmatpush.msra.mxu0 %v81
    %v83 = vand.u32 %v30, 4294901760
    %v84 = vsub.f32 %v30, %v83
    %v85 = vand.u32 %v84, 4294901760
    %v86 = vsub.f32 %v84, %v85
    %v87 = vand.u32 %v86, 4294901760
    %88 = vmatpush.msra.mxu0 %v87
    %v89 = vand.u32 %v29, 4294901760
    %v90 = vsub.f32 %v29, %v89
    %v91 = vand.u32 %v90, 4294901760
    %v92 = vsub.f32 %v90, %v91
    %v93 = vand.u32 %v92, 4294901760
    %94 = vmatpush.msra.mxu0 %v93
    %v95 = vand.u32 %v28, 4294901760
    %v96 = vsub.f32 %v28, %v95
    %v97 = vand.u32 %v96, 4294901760
    %v98 = vsub.f32 %v96, %v97
    %v99 = vand.u32 %v98, 4294901760
    %100 = vmatpush.msra.mxu0 %v99
    %v101 = vand.u32 %v27, 4294901760
    %v102 = vsub.f32 %v27, %v101
    %v103 = vand.u32 %v102, 4294901760
    %v104 = vsub.f32 %v102, %v103
    %v105 = vand.u32 %v104, 4294901760
    %106 = vmatpush.msra.mxu0 %v105
    %v107 = vand.u32 %v26, 4294901760
    %v108 = vsub.f32 %v26, %v107
    %v109 = vand.u32 %v108, 4294901760
    %v110 = vsub.f32 %v108, %v109
    %v111 = vand.u32 %v110, 4294901760
    %112 = vmatpush.msra.mxu0 %v111
    %v113 = vand.u32 %v25, 4294901760
    %v114 = vsub.f32 %v25, %v113
    %v115 = vand.u32 %v114, 4294901760
    %v116 = vsub.f32 %v114, %v115
    %v117 = vand.u32 %v116, 4294901760
    %118 = vmatpush.msra.mxu0 %v117
    %v119 = vand.u32 %v24, 4294901760
    %v120 = vsub.f32 %v24, %v119
    %v121 = vand.u32 %v120, 4294901760
    %v122 = vsub.f32 %v120, %v121
    %v123 = vand.u32 %v122, 4294901760
    %124 = vmatpush.msra.mxu0 %v123
    %v125 = vand.u32 %v23, 4294901760
    %v126 = vsub.f32 %v23, %v125
    %v127 = vand.u32 %v126, 4294901760
    %v128 = vsub.f32 %v126, %v127
    %v129 = vand.u32 %v128, 4294901760
    %130 = vmatpush.msra.mxu0 %v129
    %v131 = vand.u32 %v22, 4294901760
    %v132 = vsub.f32 %v22, %v131
    %v133 = vand.u32 %v132, 4294901760
    %v134 = vsub.f32 %v132, %v133
    %v135 = vand.u32 %v134, 4294901760
    %136 = vmatpush.msra.mxu0 %v135
    %v137 = vand.u32 %v21, 4294901760
    %v138 = vsub.f32 %v21, %v137
    %v139 = vand.u32 %v138, 4294901760
    %v140 = vsub.f32 %v138, %v139
    %v141 = vand.u32 %v140, 4294901760
    %142 = vmatpush.msra.mxu0 %v141
    %v143 = vand.u32 %v20, 4294901760
    %v144 = vsub.f32 %v20, %v143
    %v145 = vand.u32 %v144, 4294901760
    %v146 = vsub.f32 %v144, %v145
    %v147 = vand.u32 %v146, 4294901760
    %148 = vmatpush.msra.mxu0 %v147
    %v149 = vand.u32 %v19, 4294901760
    %v150 = vsub.f32 %v19, %v149
    %v151 = vand.u32 %v150, 4294901760
    %v152 = vsub.f32 %v150, %v151
    %v153 = vand.u32 %v152, 4294901760
    %154 = vmatpush.msra.mxu0 %v153
    %v155 = vand.u32 %v18, 4294901760
    %v156 = vsub.f32 %v18, %v155
    %v157 = vand.u32 %v156, 4294901760
    %v158 = vsub.f32 %v156, %v157
    %v159 = vand.u32 %v158, 4294901760
    %160 = vmatpush.msra.mxu0 %v159
    %v161 = vand.u32 %v17, 4294901760
    %v162 = vsub.f32 %v17, %v161
    %v163 = vand.u32 %v162, 4294901760
    %v164 = vsub.f32 %v162, %v163
    %v165 = vand.u32 %v164, 4294901760
    %166 = vmatpush.msra.mxu0 %v165
    %v167 = vand.u32 %v16, 4294901760
    %v168 = vsub.f32 %v16, %v167
    %v169 = vand.u32 %v168, 4294901760
    %v170 = vsub.f32 %v168, %v169
    %v171 = vand.u32 %v170, 4294901760
    %172 = vmatpush.msra.mxu0 %v171
    %v173 = vand.u32 %v15, 4294901760
    %174 = vmatmul.f32.gmra.mxu0 %v173
    %v175 = vpop.f32.mrf.mxu0
    %v176 = vadd.f32 %v75, %v175
    %177 = vdwg.mxu0
    %v178 = vand.u32 %v31, 4294901760
    %v179 = vsub.f32 %v31, %v178
    %180 = vmatpush.msra.mxu0 %v179
    %v181 = vand.u32 %v30, 4294901760
    %v182 = vsub.f32 %v30, %v181
    %183 = vmatpush.msra.mxu0 %v182
    %v184 = vand.u32 %v29, 4294901760
    %v185 = vsub.f32 %v29, %v184
    %186 = vmatpush.msra.mxu0 %v185
    %v187 = vand.u32 %v28, 4294901760
    %v188 = vsub.f32 %v28, %v187
    %189 = vmatpush.msra.mxu0 %v188
    %v190 = vand.u32 %v27, 4294901760
    %v191 = vsub.f32 %v27, %v190
    %192 = vmatpush.msra.mxu0 %v191
    %v193 = vand.u32 %v26, 4294901760
    %v194 = vsub.f32 %v26, %v193
    %195 = vmatpush.msra.mxu0 %v194
    %v196 = vand.u32 %v25, 4294901760
    %v197 = vsub.f32 %v25, %v196
    %198 = vmatpush.msra.mxu0 %v197
    %v199 = vand.u32 %v24, 4294901760
    %v200 = vsub.f32 %v24, %v199
    %201 = vmatpush.msra.mxu0 %v200
    %v202 = vand.u32 %v23, 4294901760
    %v203 = vsub.f32 %v23, %v202
    %204 = vmatpush.msra.mxu0 %v203
    %v205 = vand.u32 %v22, 4294901760
    %v206 = vsub.f32 %v22, %v205
    %207 = vmatpush.msra.mxu0 %v206
    %v208 = vand.u32 %v21, 4294901760
    %v209 = vsub.f32 %v21, %v208
    %210 = vmatpush.msra.mxu0 %v209
    %v211 = vand.u32 %v20, 4294901760
    %v212 = vsub.f32 %v20, %v211
    %213 = vmatpush.msra.mxu0 %v212
    %v214 = vand.u32 %v19, 4294901760
    %v215 = vsub.f32 %v19, %v214
    %216 = vmatpush.msra.mxu0 %v215
    %v217 = vand.u32 %v18, 4294901760
    %v218 = vsub.f32 %v18, %v217
    %219 = vmatpush.msra.mxu0 %v218
    %v220 = vand.u32 %v17, 4294901760
    %v221 = vsub.f32 %v17, %v220
    %222 = vmatpush.msra.mxu0 %v221
    %v223 = vand.u32 %v16, 4294901760
    %v224 = vsub.f32 %v16, %v223
    %225 = vmatpush.msra.mxu0 %v224
    %v226 = vand.u32 %v15, 4294901760
    %v227 = vsub.f32 %v15, %v226
    %228 = vmatmul.f32.gmra.mxu0 %v227
    %v229 = vpop.f32.mrf.mxu0
    %v230 = vadd.f32 %v176, %v229
    %231 = vdwg.mxu0
    %v232 = vand.u32 %v31, 4294901760
    %233 = vmatpush.msra.mxu0 %v232
    %v234 = vand.u32 %v30, 4294901760
    %235 = vmatpush.msra.mxu0 %v234
    %v236 = vand.u32 %v29, 4294901760
    %237 = vmatpush.msra.mxu0 %v236
    %v238 = vand.u32 %v28, 4294901760
    %239 = vmatpush.msra.mxu0 %v238
    %v240 = vand.u32 %v27, 4294901760
    %241 = vmatpush.msra.mxu0 %v240
    %v242 = vand.u32 %v26, 4294901760
    %243 = vmatpush.msra.mxu0 %v242
    %v244 = vand.u32 %v25, 4294901760
    %245 = vmatpush.msra.mxu0 %v244
    %v246 = vand.u32 %v24, 4294901760
    %247 = vmatpush.msra.mxu0 %v246
    %v248 = vand.u32 %v23, 4294901760
    %249 = vmatpush.msra.mxu0 %v248
    %v250 = vand.u32 %v22, 4294901760
    %251 = vmatpush.msra.mxu0 %v250
    %v252 = vand.u32 %v21, 4294901760
    %253 = vmatpush.msra.mxu0 %v252
    %v254 = vand.u32 %v20, 4294901760
    %255 = vmatpush.msra.mxu0 %v254
    %v256 = vand.u32 %v19, 4294901760
    %257 = vmatpush.msra.mxu0 %v256
    %v258 = vand.u32 %v18, 4294901760
    %259 = vmatpush.msra.mxu0 %v258
    %v260 = vand.u32 %v17, 4294901760
    %261 = vmatpush.msra.mxu0 %v260
    %v262 = vand.u32 %v16, 4294901760
    %263 = vmatpush.msra.mxu0 %v262
    %v264 = vand.u32 %v15, 4294901760
    %v265 = vsub.f32 %v15, %v264
    %v266 = vand.u32 %v265, 4294901760
    %267 = vmatmul.f32.gmra.mxu0 %v266
    %v268 = vpop.f32.mrf.mxu0
    %v269 = vadd.f32 %v230, %v268
    %270 = vdwg.mxu0
    %v271 = vand.u32 %v31, 4294901760
    %v272 = vsub.f32 %v31, %v271
    %v273 = vand.u32 %v272, 4294901760
    %274 = vmatpush.msra.mxu0 %v273
    %v275 = vand.u32 %v30, 4294901760
    %v276 = vsub.f32 %v30, %v275
    %v277 = vand.u32 %v276, 4294901760
    %278 = vmatpush.msra.mxu0 %v277
    %v279 = vand.u32 %v29, 4294901760
    %v280 = vsub.f32 %v29, %v279
    %v281 = vand.u32 %v280, 4294901760
    %282 = vmatpush.msra.mxu0 %v281
    %v283 = vand.u32 %v28, 4294901760
    %v284 = vsub.f32 %v28, %v283
    %v285 = vand.u32 %v284, 4294901760
    %286 = vmatpush.msra.mxu0 %v285
    %v287 = vand.u32 %v27, 4294901760
    %v288 = vsub.f32 %v27, %v287
    %v289 = vand.u32 %v288, 4294901760
    %290 = vmatpush.msra.mxu0 %v289
    %v291 = vand.u32 %v26, 4294901760
    %v292 = vsub.f32 %v26, %v291
    %v293 = vand.u32 %v292, 4294901760
    %294 = vmatpush.msra.mxu0 %v293
    %v295 = vand.u32 %v25, 4294901760
    %v296 = vsub.f32 %v25, %v295
    %v297 = vand.u32 %v296, 4294901760
    %298 = vmatpush.msra.mxu0 %v297
    %v299 = vand.u32 %v24, 4294901760
    %v300 = vsub.f32 %v24, %v299
    %v301 = vand.u32 %v300, 4294901760
    %302 = vmatpush.msra.mxu0 %v301
    %v303 = vand.u32 %v23, 4294901760
    %v304 = vsub.f32 %v23, %v303
    %v305 = vand.u32 %v304, 4294901760
    %306 = vmatpush.msra.mxu0 %v305
    %v307 = vand.u32 %v22, 4294901760
    %v308 = vsub.f32 %v22, %v307
    %v309 = vand.u32 %v308, 4294901760
    %310 = vmatpush.msra.mxu0 %v309
    %v311 = vand.u32 %v21, 4294901760
    %v312 = vsub.f32 %v21, %v311
    %v313 = vand.u32 %v312, 4294901760
    %314 = vmatpush.msra.mxu0 %v313
    %v315 = vand.u32 %v20, 4294901760
    %v316 = vsub.f32 %v20, %v315
    %v317 = vand.u32 %v316, 4294901760
    %318 = vmatpush.msra.mxu0 %v317
    %v319 = vand.u32 %v19, 4294901760
    %v320 = vsub.f32 %v19, %v319
    %v321 = vand.u32 %v320, 4294901760
    %322 = vmatpush.msra.mxu0 %v321
    %v323 = vand.u32 %v18, 4294901760
    %v324 = vsub.f32 %v18, %v323
    %v325 = vand.u32 %v324, 4294901760
    %326 = vmatpush.msra.mxu0 %v325
    %v327 = vand.u32 %v17, 4294901760
    %v328 = vsub.f32 %v17, %v327
    %v329 = vand.u32 %v328, 4294901760
    %330 = vmatpush.msra.mxu0 %v329
    %v331 = vand.u32 %v16, 4294901760
    %v332 = vsub.f32 %v16, %v331
    %v333 = vand.u32 %v332, 4294901760
    %334 = vmatpush.msra.mxu0 %v333
    %v335 = vand.u32 %v15, 4294901760
    %336 = vmatmul.f32.gmra.mxu0 %v335
    %v337 = vpop.f32.mrf.mxu0
    %v338 = vadd.f32 %v269, %v337
    %339 = vdwg.mxu0
    %v340 = vand.u32 %v31, 4294901760
    %341 = vmatpush.msra.mxu0 %v340
    %v342 = vand.u32 %v30, 4294901760
    %343 = vmatpush.msra.mxu0 %v342
    %v344 = vand.u32 %v29, 4294901760
    %345 = vmatpush.msra.mxu0 %v344
    %v346 = vand.u32 %v28, 4294901760
    %347 = vmatpush.msra.mxu0 %v346
    %v348 = vand.u32 %v27, 4294901760
    %349 = vmatpush.msra.mxu0 %v348
    %v350 = vand.u32 %v26, 4294901760
    %351 = vmatpush.msra.mxu0 %v350
    %v352 = vand.u32 %v25, 4294901760
    %353 = vmatpush.msra.mxu0 %v352
    %v354 = vand.u32 %v24, 4294901760
    %355 = vmatpush.msra.mxu0 %v354
    %v356 = vand.u32 %v23, 4294901760
    %357 = vmatpush.msra.mxu0 %v356
    %v358 = vand.u32 %v22, 4294901760
    %359 = vmatpush.msra.mxu0 %v358
    %v360 = vand.u32 %v21, 4294901760
    %361 = vmatpush.msra.mxu0 %v360
    %v362 = vand.u32 %v20, 4294901760
    %363 = vmatpush.msra.mxu0 %v362
    %v364 = vand.u32 %v19, 4294901760
    %365 = vmatpush.msra.mxu0 %v364
    %v366 = vand.u32 %v18, 4294901760
    %367 = vmatpush.msra.mxu0 %v366
    %v368 = vand.u32 %v17, 4294901760
    %369 = vmatpush.msra.mxu0 %v368
    %v370 = vand.u32 %v16, 4294901760
    %371 = vmatpush.msra.mxu0 %v370
    %v372 = vand.u32 %v15, 4294901760
    %373 = vmatmul.f32.gmra.mxu0 %v372
    %v374 = vpop.f32.mrf.mxu0
    %v375 = vadd.f32 %v338, %v374
    %376 = vdwg.mxu0
    %vm377 = vcmask 80896
    %378 = vst.msk [vmem:[#allocation2] sm:$0xff] %vm377, %v375
    // Predicated region
    $region14: #{fmodel_forward.1} parent=1 // pred_check
      _
    $region15: #{fmodel_forward.1} parent=1 // pred_check_branch
      %380 = sbr.rel (0) target = $region17
    $region16: #{fmodel_forward.1} parent=1 // pred_region
      %382 = vsyncadd [#allocation3], 0
      %s384 = sshll.u32 [#allocation2], 4
      %s385 = int_to_ptr.vmem [resolvable:$true] %s384
      %s386 = sshll.u32 %s3, 4
      %s387 = int_to_ptr.hbm [resolvable:$true] %s386
      %389 = dma.vmem_to_hbm [thread:$0]  %s385, 128, %s387, [#allocation3]
    $region17: #{fmodel_forward.1} parent=1 // pred_fallthru
      _
    // Predicated region
    $region18: #{fmodel_forward.1} parent=1 // pred_check
      _
    $region19: #{fmodel_forward.1} parent=1 // pred_check_branch
      %391 = sbr.rel (0) target = $region21
    $region20: #{fmodel_forward.1} parent=1 // pred_region
      %393 = dma.done [#allocation3], 128
    $region21: #{fmodel_forward.1} parent=1 // pred_fallthru
      _
    %394 = vsyncpa [#allocation3], 1

</llo_original>
